<compile_context>
chip_gen: v6e
topology: v6e:2x2x1
jax: 0.10.0
libtpu: 0.0.40
codegen_flags: <defaults>
</compile_context>

<pallas_src>
import functools

import jax
import jax.numpy as jnp
from jax import lax
from jax.experimental import pallas as pl
from jax.experimental.pallas import tpu as pltpu


def _round_up(n: int, m: int) -> int:
    return ((n + m - 1) // m) * m


def _adain_kernel(x_ref, lat_ref, ws_ref, wsh_ref, bs_ref, bsh_ref, o_ref, *,
                  eps: float):
    # InstanceNorm1d (affine=False) on x.view(b, 1, -1): per-row mean and
    # biased variance over the feature axis, eps inside the sqrt. f32 math.
    x = x_ref[...].astype(jnp.float32)
    mean = jnp.mean(x, axis=-1, keepdims=True)
    xc = x - mean
    var = jnp.mean(xc * xc, axis=-1, keepdims=True)
    x_norm = xc * lax.rsqrt(var + eps)                 # rsqrt -> EUP slot

    # Style projection split into scale/shift halves (no (TB, 2T) slab).
    # MXU matmul, f32 accumulation. "+1" already folded into bs at the wrapper.
    lat = lat_ref[...]
    scale = (jnp.dot(lat, ws_ref[...], preferred_element_type=jnp.float32)
             + bs_ref[...])
    shift = (jnp.dot(lat, wsh_ref[...], preferred_element_type=jnp.float32)
             + bsh_ref[...])

    o_ref[...] = (x_norm * scale + shift).astype(o_ref.dtype)


def _vmem_capacity_bytes() -> int:
    """Per-core VMEM capacity; conservative v7x fallback if the query fails."""
    try:
        return int(pltpu.get_tpu_info().vmem_capacity_bytes)
    except Exception:
        return 64 * 1024 * 1024


def _pick_batch_tile(B: int, T: int, L: int, x_bytes: int, out_bytes: int,
                     vmem_budget: int) -> int:
    """Largest multiple-of-16 row tile that fits the VMEM budget."""
    # Conservative per-row VMEM cost: x / out double-buffered, ~6 live f32
    # width-T temporaries (x, xc, x_norm, scale, shift, result), bf16 latent
    # double-buffered.
    row_bytes = T * (2 * x_bytes + 2 * out_bytes + 6 * 4) + 4 * L
    tb = max(16, (vmem_budget // max(row_bytes, 1)) // 16 * 16)
    if B >= 32:
        # Keep >= 2 grid tiles so the "parallel" batch axis can shard across
        # both TensorCores on a v7x megacore.
        tb = min(tb, _round_up(pl.cdiv(B, 2), 16))
    if tb >= B:
        tb = B    # single full block (block dims equal the array dims)
    return tb


def linear_adain(x, latent, w, bias, *, eps: float = 1e-5,
                 style_matmul_dtype=jnp.bfloat16, block_b: int | None = None):
    """LinearAdaIN forward.

    x:      (B, T)   activations (feature dim last -> lanes); pass bf16 to
                     halve HBM traffic (out matches x.dtype)
    latent: (B, L)   latent codes
    w:      (L, 2T)  Linear weight, stored transposed vs. torch (2T, L)
    bias:   (2T,)    Linear bias
    style_matmul_dtype: bf16 (fast path) or float32 (strict parity with torch)
    """
    B, T = x.shape
    L = latent.shape[1]
    assert w.shape == (L, 2 * T) and bias.shape == (2 * T,)

    # Split the Linear into scale / shift halves; fold the "+1" of
    # `scale = style[:, :T] + 1` into the scale bias (constant transform).
    w_c = w.astype(style_matmul_dtype)
    w_scale, w_shift = w_c[:, :T], w_c[:, T:]
    bias_f = bias.astype(jnp.float32)
    b_scale = (bias_f[:T] + 1.0).reshape(1, T)
    b_shift = bias_f[T:].reshape(1, T)
    lat = latent.astype(style_matmul_dtype)

    x_bytes = jnp.dtype(x.dtype).itemsize
    out_bytes = x_bytes
    vmem_cap = _vmem_capacity_bytes()
    vmem_budget = int(vmem_cap * 0.60)

    if block_b is None:
        TB = _pick_batch_tile(B, T, L, x_bytes, out_bytes, vmem_budget)
    else:
        TB = min(max(int(block_b), 1), B)
        if TB != B:
            TB = max(16, (TB // 16) * 16)

    # No wrapper-side padding: if TB does not divide B the trailing block is
    # partial. Rows are fully independent, OOB reads are garbage and OOB
    # output writes are masked, so real rows are unaffected.
    grid = (pl.cdiv(B, TB),)

    out = pl.pallas_call(
        functools.partial(_adain_kernel, eps=eps),
        out_shape=jax.ShapeDtypeStruct((B, T), x.dtype),
        grid=grid,
        in_specs=[
            pl.BlockSpec((TB, T), lambda i: (i, 0)),   # x: tiled over batch
            pl.BlockSpec((TB, L), lambda i: (i, 0)),   # latent: tiled over batch
            pl.BlockSpec((L, T), lambda i: (0, 0)),    # W_scale: resident
            pl.BlockSpec((L, T), lambda i: (0, 0)),    # W_shift: resident
            pl.BlockSpec((1, T), lambda i: (0, 0)),    # bias_scale (+1 folded)
            pl.BlockSpec((1, T), lambda i: (0, 0)),    # bias_shift
        ],
        out_specs=pl.BlockSpec((TB, T), lambda i: (i, 0)),
        compiler_params=pltpu.CompilerParams(
            # Batch tiles are independent -> shard across TCs on v7x megacore.
            dimension_semantics=("parallel",),
            vmem_limit_bytes=min(int(vmem_cap * 0.80), 100 * 1024 * 1024),
        ),
    )(x, lat, w_scale, w_shift, b_scale, b_shift)

    return out


def linear_adain_ref(x, latent, w, bias, *, eps: float = 1e-5,
                     matmul_dtype=jnp.float32):
    """Pure-JAX reference mirroring the PyTorch forward."""
    xf = x.astype(jnp.float32)
    mean = jnp.mean(xf, axis=-1, keepdims=True)
    var = jnp.mean((xf - mean) ** 2, axis=-1, keepdims=True)  # biased
    x_norm = (xf - mean) / jnp.sqrt(var + eps)
    style = jnp.dot(latent.astype(matmul_dtype), w.astype(matmul_dtype),
                    preferred_element_type=jnp.float32) + bias.astype(jnp.float32)
    T = x.shape[-1]
    scale, shift = style[:, :T], style[:, T:]
    return x_norm * (scale + 1.0) + shift


if __name__ == "__main__":
    # Small, deterministic setup consistent with the module:
    #   latent_size = 32, target_size = 128, batch = 4
    B, latent_size, target_size = 4, 32, 128

    key = jax.random.PRNGKey(0)
    kx, kl, kw, kb = jax.random.split(key, 4)

    x = jax.random.normal(kx, (B, target_size), dtype=jnp.float32)
    latent = jax.random.normal(kl, (B, latent_size), dtype=jnp.float32)

    # nn.Linear(latent_size, 2*target_size): weight (2T, L), bias (2T,).
    # Deterministic uniform init in the kaiming-uniform range; W stored
    # transposed as (L, 2T) for the in-kernel matmul.
    bound = 1.0 / (latent_size ** 0.5)
    w_torch = jax.random.uniform(
        kw, (2 * target_size, latent_size), minval=-bound, maxval=bound,
        dtype=jnp.float32)
    bias = jax.random.uniform(
        kb, (2 * target_size,), minval=-bound, maxval=bound, dtype=jnp.float32)
    w = w_torch.T  # (L, 2T)

    # --- Default (bf16 style matmul) path, tiny batch (grid = 1, full block).
    out = jax.block_until_ready(linear_adain(x, latent, w, bias))
    assert out.shape == (B, target_size)
    ref_bf16 = linear_adain_ref(x, latent, w, bias, matmul_dtype=jnp.bfloat16)
    assert jnp.allclose(out, ref_bf16, atol=1e-4, rtol=1e-4), (
        float(jnp.max(jnp.abs(out - ref_bf16))))
    ref_f32 = linear_adain_ref(x, latent, w, bias)
    assert jnp.allclose(out, ref_f32, atol=5e-2, rtol=5e-2), (
        float(jnp.max(jnp.abs(out - ref_f32))))

    # --- Strict-parity path: f32 style matmul.
    out_strict = jax.block_until_ready(
        linear_adain(x, latent, w, bias, style_matmul_dtype=jnp.float32))
    assert jnp.allclose(out_strict, ref_f32, atol=1e-4, rtol=1e-4), (
        float(jnp.max(jnp.abs(out_strict - ref_f32))))

    # --- Tiled path: grid > 1, batch not a multiple of the tile (partial
    #     trailing block, no wrapper padding).
    B2 = 300
    k2x, k2l = jax.random.split(jax.random.PRNGKey(1))
    x2 = jax.random.normal(k2x, (B2, target_size), dtype=jnp.float32)
    lat2 = jax.random.normal(k2l, (B2, latent_size), dtype=jnp.float32)
    out2 = jax.block_until_ready(linear_adain(x2, lat2, w, bias))
    ref2 = linear_adain_ref(x2, lat2, w, bias, matmul_dtype=jnp.bfloat16)
    assert out2.shape == (B2, target_size)
    assert jnp.allclose(out2, ref2, atol=1e-4, rtol=1e-4), (
        float(jnp.max(jnp.abs(out2 - ref2))))

    # --- bf16 activations/output (halves HBM traffic; loose numeric check).
    out_bf16 = jax.block_until_ready(
        linear_adain(x2.astype(jnp.bfloat16), lat2, w, bias))
    assert out_bf16.dtype == jnp.bfloat16 and out_bf16.shape == (B2, target_size)
    assert bool(jnp.all(jnp.isfinite(out_bf16.astype(jnp.float32))))
    assert jnp.allclose(out_bf16.astype(jnp.float32), ref2,
                        atol=7.5e-2, rtol=7.5e-2), (
        float(jnp.max(jnp.abs(out_bf16.astype(jnp.float32) - ref2))))

    print("KERNEL_OK")
</pallas_src>

<mosaic_0001>
module attributes {stable_mosaic.version = 11 : i64} {
  func.func @_adain_kernel(%arg0: i32, %arg1: memref<4x128xf32, #tpu.memory_space<vmem>>, %arg2: memref<4x32xbf16, #tpu.memory_space<vmem>>, %arg3: memref<32x128xbf16, #tpu.memory_space<vmem>>, %arg4: memref<32x128xbf16, #tpu.memory_space<vmem>>, %arg5: memref<1x128xf32, #tpu.memory_space<vmem>>, %arg6: memref<1x128xf32, #tpu.memory_space<vmem>>, %arg7: memref<4x128xf32, #tpu.memory_space<vmem>>) attributes {dimension_semantics = [#tpu.dimension_semantics<parallel>], iteration_bounds = array<i64: 1>, scalar_prefetch = 0 : i64, scratch_operands = 0 : i64, tpu.core_type = #tpu.core_type<tc>, window_params = [{transform_indices = @transform_0, window_bounds = array<i64: 4, 128>}, {transform_indices = @transform_1, window_bounds = array<i64: 4, 32>}, {pipeline_mode = #tpu.pipeline_mode<synchronous>, transform_indices = @transform_2, window_bounds = array<i64: 32, 128>}, {pipeline_mode = #tpu.pipeline_mode<synchronous>, transform_indices = @transform_3, window_bounds = array<i64: 32, 128>}, {pipeline_mode = #tpu.pipeline_mode<synchronous>, transform_indices = @transform_4, window_bounds = array<i64: 1, 128>}, {pipeline_mode = #tpu.pipeline_mode<synchronous>, transform_indices = @transform_5, window_bounds = array<i64: 1, 128>}, {transform_indices = @transform_6, window_bounds = array<i64: 4, 128>}]} {
    %c0 = arith.constant 0 : index
    %c0_0 = arith.constant 0 : index
    %0 = vector.load %arg1[%c0, %c0_0] : memref<4x128xf32, #tpu.memory_space<vmem>>, vector<4x128xf32>
    %cst = arith.constant dense<0.000000e+00> : vector<4xf32>
    %1 = vector.multi_reduction <add>, %0, %cst [1] : vector<4x128xf32> to vector<4xf32>
    %2 = vector.shape_cast %1 : vector<4xf32> to vector<4x1xf32>
    %cst_1 = arith.constant 1.280000e+02 : f32
    %3 = vector.broadcast %cst_1 : f32 to vector<4x1xf32>
    %4 = arith.divf %2, %3 : vector<4x1xf32>
    %5 = vector.broadcast %4 : vector<4x1xf32> to vector<4x128xf32>
    %6 = arith.subf %0, %5 : vector<4x128xf32>
    %7 = arith.mulf %6, %6 : vector<4x128xf32>
    %cst_2 = arith.constant dense<0.000000e+00> : vector<4xf32>
    %8 = vector.multi_reduction <add>, %7, %cst_2 [1] : vector<4x128xf32> to vector<4xf32>
    %9 = vector.shape_cast %8 : vector<4xf32> to vector<4x1xf32>
    %cst_3 = arith.constant 1.280000e+02 : f32
    %10 = vector.broadcast %cst_3 : f32 to vector<4x1xf32>
    %11 = arith.divf %9, %10 : vector<4x1xf32>
    %cst_4 = arith.constant 9.99999974E-6 : f32
    %12 = vector.broadcast %cst_4 : f32 to vector<4x1xf32>
    %13 = arith.addf %11, %12 : vector<4x1xf32>
    %14 = math.rsqrt %13 : vector<4x1xf32>
    %15 = vector.broadcast %14 : vector<4x1xf32> to vector<4x128xf32>
    %16 = arith.mulf %6, %15 : vector<4x128xf32>
    %c0_5 = arith.constant 0 : index
    %c0_6 = arith.constant 0 : index
    %17 = vector.load %arg2[%c0_5, %c0_6] : memref<4x32xbf16, #tpu.memory_space<vmem>>, vector<4x32xbf16>
    %c0_7 = arith.constant 0 : index
    %c0_8 = arith.constant 0 : index
    %18 = vector.load %arg3[%c0_7, %c0_8] : memref<32x128xbf16, #tpu.memory_space<vmem>>, vector<32x128xbf16>
    %cst_9 = arith.constant dense<0.000000e+00> : vector<4x128xf32>
    %19 = tpu.matmul %17, %18, %cst_9 {dimension_numbers = #tpu.dot_dimension_numbers<[1], [0], [0], [1], [0, 0, 1, 1], [], []>} : vector<4x32xbf16>, vector<32x128xbf16>, vector<4x128xf32> -> vector<4x128xf32>
    %c0_10 = arith.constant 0 : index
    %c0_11 = arith.constant 0 : index
    %20 = vector.load %arg5[%c0_10, %c0_11] : memref<1x128xf32, #tpu.memory_space<vmem>>, vector<1x128xf32>
    %21 = vector.broadcast %20 : vector<1x128xf32> to vector<4x128xf32>
    %22 = arith.addf %19, %21 : vector<4x128xf32>
    %c0_12 = arith.constant 0 : index
    %c0_13 = arith.constant 0 : index
    %23 = vector.load %arg4[%c0_12, %c0_13] : memref<32x128xbf16, #tpu.memory_space<vmem>>, vector<32x128xbf16>
    %cst_14 = arith.constant dense<0.000000e+00> : vector<4x128xf32>
    %24 = tpu.matmul %17, %23, %cst_14 {dimension_numbers = #tpu.dot_dimension_numbers<[1], [0], [0], [1], [0, 0, 1, 1], [], []>} : vector<4x32xbf16>, vector<32x128xbf16>, vector<4x128xf32> -> vector<4x128xf32>
    %c0_15 = arith.constant 0 : index
    %c0_16 = arith.constant 0 : index
    %25 = vector.load %arg6[%c0_15, %c0_16] : memref<1x128xf32, #tpu.memory_space<vmem>>, vector<1x128xf32>
    %26 = vector.broadcast %25 : vector<1x128xf32> to vector<4x128xf32>
    %27 = arith.addf %24, %26 : vector<4x128xf32>
    %28 = arith.mulf %16, %22 : vector<4x128xf32>
    %29 = arith.addf %28, %27 : vector<4x128xf32>
    %c0_17 = arith.constant 0 : index
    %c0_18 = arith.constant 0 : index
    %30 = vector.load %arg7[%c0_17, %c0_18] : memref<4x128xf32, #tpu.memory_space<vmem>>, vector<4x128xf32>
    tpu.vector_store %arg7[%c0_17, %c0_18], %29 {strides = array<i32>} : memref<4x128xf32, #tpu.memory_space<vmem>>, vector<4x128xf32>,
    return
  }
  func.func @transform_0(%arg0: i32) -> (i32, i32) {
    %c0_i32 = arith.constant 0 : i32
    %c0_i32_0 = arith.constant 0 : i32
    return %arg0, %c0_i32 : i32, i32
  }
  func.func @transform_1(%arg0: i32) -> (i32, i32) {
    %c0_i32 = arith.constant 0 : i32
    %c0_i32_0 = arith.constant 0 : i32
    return %arg0, %c0_i32 : i32, i32
  }
  func.func @transform_2(%arg0: i32) -> (i32, i32) {
    %c0_i32 = arith.constant 0 : i32
    %c0_i32_0 = arith.constant 0 : i32
    %c0_i32_1 = arith.constant 0 : i32
    return %c0_i32, %c0_i32_0 : i32, i32
  }
  func.func @transform_3(%arg0: i32) -> (i32, i32) {
    %c0_i32 = arith.constant 0 : i32
    %c0_i32_0 = arith.constant 0 : i32
    %c0_i32_1 = arith.constant 0 : i32
    return %c0_i32, %c0_i32_0 : i32, i32
  }
  func.func @transform_4(%arg0: i32) -> (i32, i32) {
    %c0_i32 = arith.constant 0 : i32
    %c0_i32_0 = arith.constant 0 : i32
    %c0_i32_1 = arith.constant 0 : i32
    return %c0_i32, %c0_i32_0 : i32, i32
  }
  func.func @transform_5(%arg0: i32) -> (i32, i32) {
    %c0_i32 = arith.constant 0 : i32
    %c0_i32_0 = arith.constant 0 : i32
    %c0_i32_1 = arith.constant 0 : i32
    return %c0_i32, %c0_i32_0 : i32, i32
  }
  func.func @transform_6(%arg0: i32) -> (i32, i32) {
    %c0_i32 = arith.constant 0 : i32
    %c0_i32_0 = arith.constant 0 : i32
    return %arg0, %c0_i32 : i32, i32
  }
}

</mosaic_0001>

<llo_original>
// kernel: tpu_custom_call.1
$region0: #{tpu_custom_call.1}
  #allocation0 [shape = 'u32[]', space=smem, size = 0x4, offset = 0x4, fixed_abs, tag = 'smem constant byte address 0x4 - core index']
  #allocation1 [shape = 'u32[144,128]{1,0:T(1,128)}', space=vmem, size = 0x12000, scoped, tag = 'internal scratch']
  %s0 = inlined_call_operand.hbm [shape: f32[4,128], index: 0, kind: input, shape index: {}]
  %s1 = inlined_call_operand.hbm [shape: bf16[4,32], index: 1, kind: input, shape index: {}]
  %s2 = inlined_call_operand.hbm [shape: bf16[32,128], index: 2, kind: input, shape index: {}]
  %s3 = inlined_call_operand.hbm [shape: bf16[32,128], index: 3, kind: input, shape index: {}]
  %s4 = inlined_call_operand.vmem [shape: f32[1,128], index: 4, kind: input, shape index: {}]
  %s5 = inlined_call_operand.vmem [shape: f32[1,128], index: 5, kind: input, shape index: {}]
  %s6 = inlined_call_operand.hbm [shape: f32[4,128], index: 6, kind: output, shape index: {}]
  %s7 = sld [smem:[#allocation0]]
  $region50: #{tpu_custom_call.1} parent=0
    _
  %s9 = ssub.s32 1, %s7
  %s10 = scalar_select 0, %s9, %s7
  $region1: #{tpu_custom_call.1} parent=0
    #allocation2 [shape = 'u8[2048]{0}', space=vmem, size = 0x800, scoped, tag = 'input window, operand 0, single buffered']
    #allocation3 [shape = 's32[1]{0}', space=sflag, size = 0x4, scoped, tag = 'scoped memory for tpu_custom_call.1']
    #allocation4 [shape = 's32[1]{0}', space=sflag, size = 0x4, scoped, tag = 'scoped memory for tpu_custom_call.1']
    #allocation5 [shape = 'u8[1024]{0}', space=vmem, size = 0x400, scoped, tag = 'input window, operand 1, single buffered']
    #allocation6 [shape = 's32[1]{0}', space=sflag, size = 0x4, scoped, tag = 'scoped memory for tpu_custom_call.1']
    #allocation7 [shape = 'u8[8192]{0}', space=vmem, size = 0x2000, scoped, tag = 'input window, operand 2, single buffered']
    #allocation8 [shape = 'u8[8192]{0}', space=vmem, size = 0x2000, scoped, tag = 'input window, operand 3, single buffered']
    #allocation9 [shape = 's32[1]{0}', space=sflag, size = 0x4, scoped, tag = 'scoped memory for tpu_custom_call.1']
    #allocation10 [shape = 'u8[2048]{0}', space=vmem, size = 0x800, scoped, tag = 'output window, operand 0, single buffered']
    %11 = vsyncpa [#allocation3], 0
    %12 = vsyncpa [#allocation6], 0
    %13 = vsyncpa [#allocation9], 0
    %14 = vsyncpa [#allocation4], 0
    // Predicated region
    $region2: #{tpu_custom_call.1} parent=1 // pred_check
      _
    $region3: #{tpu_custom_call.1} parent=1 // pred_check_branch
      %16 = sbr.rel (0) target = $region5
    $region4: #{tpu_custom_call.1} parent=1 // pred_region
      %s18 = ssub.s32 64, 64
      %19 = vsyncadd [#allocation3], %s18
      %s21 = sshll.u32 [#allocation2], 4
      %s22 = int_to_ptr.vmem [resolvable:$true] %s21
      %24 = dma.hbm_to_vmem [thread:$0]  %s0, 64, %s22, [#allocation3]
    $region5: #{tpu_custom_call.1} parent=1 // pred_fallthru
      _
    // Predicated region
    $region6: #{tpu_custom_call.1} parent=1 // pred_check
      _
    $region7: #{tpu_custom_call.1} parent=1 // pred_check_branch
      %26 = sbr.rel (0) target = $region9
    $region8: #{tpu_custom_call.1} parent=1 // pred_region
      %s28 = ssub.s32 32, 32
      %29 = vsyncadd [#allocation6], %s28
      %s31 = sshll.u32 [#allocation5], 4
      %s32 = int_to_ptr.vmem [resolvable:$true] %s31
      %34 = dma.hbm_to_vmem [thread:$0]  %s1, 32, %s32, [#allocation6]
    $region9: #{tpu_custom_call.1} parent=1 // pred_fallthru
      _
    // Predicated region
    $region10: #{tpu_custom_call.1} parent=1 // pred_check
      _
    $region11: #{tpu_custom_call.1} parent=1 // pred_check_branch
      %36 = sbr.rel (0) target = $region13
    $region12: #{tpu_custom_call.1} parent=1 // pred_region
      %s38 = ssub.s32 256, 256
      %39 = vsyncadd [#allocation6], %s38
      %s40 = sshll.u32 [#allocation7], 4
      %s41 = int_to_ptr.vmem [resolvable:$true] %s40
      %46 = dma.hbm_to_vmem [thread:$0]  %s2, 256, %s41, [#allocation6], 64, 64, 4
    $region13: #{tpu_custom_call.1} parent=1 // pred_fallthru
      _
    // Predicated region
    $region14: #{tpu_custom_call.1} parent=1 // pred_check
      _
    $region15: #{tpu_custom_call.1} parent=1 // pred_check_branch
      %48 = sbr.rel (0) target = $region17
    $region16: #{tpu_custom_call.1} parent=1 // pred_region
      %s50 = ssub.s32 256, 256
      %51 = vsyncadd [#allocation9], %s50
      %s52 = sshll.u32 [#allocation8], 4
      %s53 = int_to_ptr.vmem [resolvable:$true] %s52
      %58 = dma.hbm_to_vmem [thread:$0]  %s3, 256, %s53, [#allocation9], 64, 64, 4
    $region17: #{tpu_custom_call.1} parent=1 // pred_fallthru
      _
    // Predicated region
    $region18: #{tpu_custom_call.1} parent=1 // pred_check
      _
    $region19: #{tpu_custom_call.1} parent=1 // pred_check_branch
      %60 = sbr.rel (0) target = $region21
    $region20: #{tpu_custom_call.1} parent=1 // pred_region
      _
    $region21: #{tpu_custom_call.1} parent=1 // pred_fallthru
      _
    // Predicated region
    $region22: #{tpu_custom_call.1} parent=1 // pred_check
      _
    $region23: #{tpu_custom_call.1} parent=1 // pred_check_branch
      %62 = sbr.rel (0) target = $region25
    $region24: #{tpu_custom_call.1} parent=1 // pred_region
      _
    $region25: #{tpu_custom_call.1} parent=1 // pred_fallthru
      _
    // Predicated region
    $region26: #{tpu_custom_call.1} parent=1 // pred_check
      _
    $region27: #{tpu_custom_call.1} parent=1 // pred_check_branch
      %64 = sbr.rel (0) target = $region29
    $region28: #{tpu_custom_call.1} parent=1 // pred_region
      %65 = dma.done [#allocation3], 64
    $region29: #{tpu_custom_call.1} parent=1 // pred_fallthru
      _
    // Predicated region
    $region30: #{tpu_custom_call.1} parent=1 // pred_check
      _
    $region31: #{tpu_custom_call.1} parent=1 // pred_check_branch
      %67 = sbr.rel (0) target = $region33
    $region32: #{tpu_custom_call.1} parent=1 // pred_region
      %68 = dma.done [#allocation6], 32
    $region33: #{tpu_custom_call.1} parent=1 // pred_fallthru
      _
    // Predicated region
    $region34: #{tpu_custom_call.1} parent=1 // pred_check
      _
    $region35: #{tpu_custom_call.1} parent=1 // pred_check_branch
      %70 = sbr.rel (0) target = $region37
    $region36: #{tpu_custom_call.1} parent=1 // pred_region
      %71 = dma.done [#allocation6], 256
    $region37: #{tpu_custom_call.1} parent=1 // pred_fallthru
      _
    // Predicated region
    $region38: #{tpu_custom_call.1} parent=1 // pred_check
      _
    $region39: #{tpu_custom_call.1} parent=1 // pred_check_branch
      %73 = sbr.rel (0) target = $region41
    $region40: #{tpu_custom_call.1} parent=1 // pred_region
      %74 = dma.done [#allocation9], 256
    $region41: #{tpu_custom_call.1} parent=1 // pred_fallthru
      _
    %v76 = vld [vmem:[#allocation2] sm:$0xf]
    %vm77 = vcmask 1043456
    %v78 = vsel %vm77, %v76, 0.0
    %79 = vadd.xlane.f32.xlu0 %v78
    %v80 = vpop.xlane.xlu0 %79
    %v81 = vrcp.pop 128.0
    %v82 = vmul.f32 %v80, %v81
    %v83 = vsub.f32 %v76, %v82
    %v84 = vmul.f32 %v83, %v83
    %v85 = vsel %vm77, %v84, 0.0
    %86 = vadd.xlane.f32.xlu0 %v85
    %v87 = vpop.xlane.xlu0 %86
    %v88 = vmul.f32 %v87, %v81
    %v89 = vadd.f32 %v88, 1e-05
    %v90 = vrsqrt.pop %v89
    %v91 = vmul.f32 %v83, %v90
    %v92 = vld [vmem:[#allocation5] sm:$0x3]
    %v93 = vld [vmem:[#allocation7] sm:$0xf]
    %v94 = vld [vmem:[#allocation7 + $0x4] sm:$0xf]
    %v95 = vld [vmem:[#allocation7 + $0x8] sm:$0xf]
    %v96 = vld [vmem:[#allocation7 + $0xc] sm:$0xf]
    %v97 = vld [vmem:[%s4] sm:$0x1]
    %v99 = vlaneseq
    %v100 = vshrl.u32 %v99, 7
    %v101 = vsub.s32 0, %v100
    %v102 = vrot.slane %v97, %v101
    %v108 = vunpack.c.l.b16 %v93
    %v109 = vunpack.c.l.b16 %v94
    %v110 = vunpack.c.l.b16 %v95
    %v111 = vunpack.c.l.b16 %v96
    %v112 = vpack.c.b16 %v109, %v108
    %v113 = vpack.c.b16 %v111, %v110
    %vm116 = vcmask 261120
    %v118 = vsel %vm116, %v92, 0
    %120 = vmatprep.subr.bf16.mxu0 0
    %121 = vmatpush1.bf16.msra.mxu0 0
    %122 = vmatprep.subr.bf16.mxu0 0
    %123 = vmatpush1.bf16.msra.mxu0 0
    %124 = vmatprep.subr.bf16.mxu0 0
    %125 = vmatpush1.bf16.msra.mxu0 0
    %126 = vmatprep.subr.bf16.mxu0 0
    %127 = vmatpush1.bf16.msra.mxu0 0
    %128 = vmatprep.subr.bf16.mxu0 0
    %129 = vmatpush1.bf16.msra.mxu0 0
    %130 = vmatprep.subr.bf16.mxu0 0
    %131 = vmatpush1.bf16.msra.mxu0 0
    %132 = vmatprep.subr.bf16.mxu0 0
    %133 = vmatpush1.bf16.msra.mxu0 %v113
    %134 = vmatprep.subr.bf16.mxu0 0
    %135 = vmatpush1.bf16.msra.mxu0 %v112
    %136 = vmatprep.subr.bf16.mxu0 0
    %137 = vmatpush2.bf16.msra.mxu0 0
    %138 = vmatprep.subr.bf16.mxu0 0
    %139 = vmatpush2.bf16.msra.mxu0 0
    %140 = vmatprep.subr.bf16.mxu0 0
    %141 = vmatpush2.bf16.msra.mxu0 0
    %142 = vmatprep.subr.bf16.mxu0 0
    %143 = vmatpush2.bf16.msra.mxu0 0
    %144 = vmatprep.subr.bf16.mxu0 0
    %145 = vmatpush2.bf16.msra.mxu0 0
    %146 = vmatprep.subr.bf16.mxu0 0
    %147 = vmatpush2.bf16.msra.mxu0 0
    %148 = vmatprep.subr.bf16.mxu0 0
    %149 = vmatpush2.bf16.msra.mxu0 0
    %150 = vmatprep.subr.bf16.mxu0 0
    %151 = vmatpush2.bf16.msra.mxu0 0
    %152 = vmatprep.mubr.bf16.mxu0 0
    %153 = vmatmul.mubr.bf16.gmra.mxu0 %v118
    %v154 = vpop.f32.mrf.mxu0
    %v155 = vadd.f32 %v102, %v154
    %v156 = vpop.f32.mrf.mxu0
    %v157 = vpop.f32.mrf.mxu0
    %v158 = vpop.f32.mrf.mxu0
    %159 = vdwg.mxu0
    %v160 = vld [vmem:[#allocation8] sm:$0xf]
    %v161 = vld [vmem:[#allocation8 + $0x4] sm:$0xf]
    %v162 = vld [vmem:[#allocation8 + $0x8] sm:$0xf]
    %v163 = vld [vmem:[#allocation8 + $0xc] sm:$0xf]
    %v164 = vld [vmem:[%s5] sm:$0x1]
    %v166 = vlaneseq
    %v167 = vshrl.u32 %v166, 7
    %v168 = vsub.s32 0, %v167
    %v169 = vrot.slane %v164, %v168
    %v175 = vunpack.c.l.b16 %v160
    %v176 = vunpack.c.l.b16 %v161
    %v177 = vunpack.c.l.b16 %v162
    %v178 = vunpack.c.l.b16 %v163
    %v179 = vpack.c.b16 %v176, %v175
    %v180 = vpack.c.b16 %v178, %v177
    %183 = vmatprep.subr.bf16.mxu0 0
    %184 = vmatpush1.bf16.msra.mxu0 0
    %185 = vmatprep.subr.bf16.mxu0 0
    %186 = vmatpush1.bf16.msra.mxu0 0
    %187 = vmatprep.subr.bf16.mxu0 0
    %188 = vmatpush1.bf16.msra.mxu0 0
    %189 = vmatprep.subr.bf16.mxu0 0
    %190 = vmatpush1.bf16.msra.mxu0 0
    %191 = vmatprep.subr.bf16.mxu0 0
    %192 = vmatpush1.bf16.msra.mxu0 0
    %193 = vmatprep.subr.bf16.mxu0 0
    %194 = vmatpush1.bf16.msra.mxu0 0
    %195 = vmatprep.subr.bf16.mxu0 0
    %196 = vmatpush1.bf16.msra.mxu0 %v180
    %197 = vmatprep.subr.bf16.mxu0 0
    %198 = vmatpush1.bf16.msra.mxu0 %v179
    %199 = vmatprep.subr.bf16.mxu0 0
    %200 = vmatpush2.bf16.msra.mxu0 0
    %201 = vmatprep.subr.bf16.mxu0 0
    %202 = vmatpush2.bf16.msra.mxu0 0
    %203 = vmatprep.subr.bf16.mxu0 0
    %204 = vmatpush2.bf16.msra.mxu0 0
    %205 = vmatprep.subr.bf16.mxu0 0
    %206 = vmatpush2.bf16.msra.mxu0 0
    %207 = vmatprep.subr.bf16.mxu0 0
    %208 = vmatpush2.bf16.msra.mxu0 0
    %209 = vmatprep.subr.bf16.mxu0 0
    %210 = vmatpush2.bf16.msra.mxu0 0
    %211 = vmatprep.subr.bf16.mxu0 0
    %212 = vmatpush2.bf16.msra.mxu0 0
    %213 = vmatprep.subr.bf16.mxu0 0
    %214 = vmatpush2.bf16.msra.mxu0 0
    %215 = vmatprep.mubr.bf16.mxu0 0
    %216 = vmatmul.mubr.bf16.gmra.mxu0 %v118
    %v217 = vpop.f32.mrf.mxu0
    %v218 = vadd.f32 %v169, %v217
    %v219 = vpop.f32.mrf.mxu0
    %v220 = vpop.f32.mrf.mxu0
    %v221 = vpop.f32.mrf.mxu0
    %222 = vdwg.mxu0
    %v223 = vmul.f32 %v91, %v155
    %v224 = vadd.f32 %v223, %v218
    %225 = vst [vmem:[#allocation10] sm:$0xf] %v224
    // Predicated region
    $region42: #{tpu_custom_call.1} parent=1 // pred_check
      _
    $region43: #{tpu_custom_call.1} parent=1 // pred_check_branch
      %227 = sbr.rel (0) target = $region45
    $region44: #{tpu_custom_call.1} parent=1 // pred_region
      %s229 = ssub.s32 64, 64
      %230 = vsyncadd [#allocation4], %s229
      %s232 = sshll.u32 [#allocation10], 4
      %s233 = int_to_ptr.vmem [resolvable:$true] %s232
      %235 = dma.vmem_to_hbm [thread:$0]  %s233, 64, %s6, [#allocation4]
    $region45: #{tpu_custom_call.1} parent=1 // pred_fallthru
      _
    // Predicated region
    $region46: #{tpu_custom_call.1} parent=1 // pred_check
      _
    $region47: #{tpu_custom_call.1} parent=1 // pred_check_branch
      %237 = sbr.rel (0) target = $region49
    $region48: #{tpu_custom_call.1} parent=1 // pred_region
      %238 = dma.done [#allocation4], 64
    $region49: #{tpu_custom_call.1} parent=1 // pred_fallthru
      _
    %239 = vsyncpa [#allocation3], 1
    %240 = vsyncpa [#allocation6], 1
    %241 = vsyncpa [#allocation9], 1
    %242 = vsyncpa [#allocation4], 1

</llo_original>
